<compile_context>
chip_gen: v5e
topology: v5e:2x2
jax: 0.10.0
libtpu: 0.0.40
codegen_flags: <defaults>
</compile_context>

<pallas_src>
import math
from functools import partial

import jax
import jax.numpy as jnp
from jax.experimental import pallas as pl
from jax.experimental.pallas import tpu as pltpu


_SUBLANE = {4: 8, 2: 16, 1: 32}


def _round_up(x, m):
    return ((x + m - 1) // m) * m


def _smearing_kernel(d_ref, p_ref, o_ref, *, centered, n_gauss):
    # d_ref: (bm, r)  distances tile
    # p_ref: (2, r*G) [offsets_tiled; coeff_tiled]  or (1, r*G) [coeff_tiled]
    # o_ref: (bm, r*G)
    d = d_ref[...].astype(jnp.float32)                      # (bm, r)
    bm, r = d.shape
    G = n_gauss
    if r == 1:
        d_exp = d                                           # (bm, 1) broadcasts
    else:
        # Lane-replicate each of the r distances G times -> (bm, r*G), so the
        # subtract / mul / exp below run at full 128-lane width.  The broadcasts
        # and the lane-concatenate land on the otherwise-idle XLU slot.
        d_exp = jnp.concatenate(
            [jnp.broadcast_to(d[:, j:j + 1], (bm, G)) for j in range(r)],
            axis=-1)
    p = p_ref[...]                                          # (2|1, r*G) f32
    coeff = p[-1:, :]                                       # (1, r*G)
    diff = d_exp if centered else d_exp - p[0:1, :]
    o_ref[...] = jnp.exp(coeff * (diff * diff)).astype(o_ref.dtype)


def _pick_block_rows(n_rows, lane_width, out_itemsize, in_itemsize,
                     *, target_bytes=8 << 20, max_rows=65536):
    """Rows per tile: ~8 MiB output blocks, sublane-aligned, >= ~4 grid steps."""
    sub = max(_SUBLANE.get(out_itemsize, 8), _SUBLANE.get(in_itemsize, 8))
    rows = max(sub, target_bytes // max(1, lane_width * out_itemsize))
    rows = min(rows, max_rows)
    # Keep the grid length >= ~4 when possible: v7x has 2 TensorCores and the
    # single "parallel" grid axis can only shard across them if grid > 1.
    quarter = _round_up(max(1, -(-n_rows // 4)), sub)
    rows = min(rows, max(sub, quarter))
    rows = min(rows, max(n_rows, sub))
    rows = max(sub, (rows // sub) * sub)
    return int(rows)


def gaussian_smearing(distances, offsets, widths, centered=False, out_dtype=None):
    """Pallas TPU equivalent of nff.nn.layers.gaussian_smearing.

    distances: (..., 1) (or (...,)) interatomic distances
    offsets, widths: (n_gaussians,)
    out_dtype: optional output dtype (e.g. jnp.bfloat16) to halve write traffic.
    returns: (..., n_gaussians)
    """
    distances = jnp.asarray(distances)
    offsets = jnp.asarray(offsets, dtype=jnp.float32)
    widths = jnp.asarray(widths, dtype=jnp.float32)
    G = int(offsets.shape[0])

    # A trailing size-1 dim broadcasts against the (G,) offsets (standard nff usage).
    orig_shape = distances.shape
    lead_shape = orig_shape[:-1] if (orig_shape and orig_shape[-1] == 1) else orig_shape
    N = int(math.prod(lead_shape)) if lead_shape else 1

    if out_dtype is None:
        out_dtype = (distances.dtype if jnp.issubdtype(distances.dtype, jnp.floating)
                     else jnp.float32)
    out_dtype = jnp.dtype(out_dtype)

    # Precompute the Gaussian coefficient outside the kernel (no in-kernel divides).
    if centered:
        coeff = -0.5 / (offsets * offsets)
    else:
        coeff = -0.5 / (widths * widths)

    if N == 0:
        return jnp.zeros((*lead_shape, G), out_dtype)

    # Lane-dense repack factor: pack r distance rows of G gaussians into one
    # 128-lane output row.  Fallback (r=1) when G does not divide 128 nicely.
    r = 128 // G if (8 <= G < 128 and 128 % G == 0) else 1
    L = r * G

    d_flat = distances.reshape(N)
    rows = -(-N // r)
    Np = rows * r
    if Np != N:
        d_flat = jnp.pad(d_flat, (0, Np - N))
    d2 = d_flat.reshape(rows, r)

    # Fused resident params: [offsets; coeff] tiled r times along lanes.
    if centered:
        params = jnp.tile(coeff.reshape(1, G), (1, r))                   # (1, L)
    else:
        params = jnp.tile(jnp.stack([offsets, coeff], axis=0), (1, r))   # (2, L)

    bm = _pick_block_rows(rows, L, out_dtype.itemsize, d2.dtype.itemsize)
    grid = (pl.cdiv(rows, bm),)   # ragged rows handled by clipped last block

    out = pl.pallas_call(
        partial(_smearing_kernel, centered=centered, n_gauss=G),
        out_shape=jax.ShapeDtypeStruct((rows, L), out_dtype),
        grid=grid,
        in_specs=[
            pl.BlockSpec((bm, r), lambda i: (i, 0)),         # distances tile
            pl.BlockSpec(params.shape, lambda i: (0, 0)),    # offsets+coeff (resident)
        ],
        out_specs=pl.BlockSpec((bm, L), lambda i: (i, 0)),
        compiler_params=pltpu.CompilerParams(
            dimension_semantics=("parallel",),
            vmem_limit_bytes=48 << 20,
        ),
    )(d2, params)

    out = out.reshape(Np, G)
    if Np != N:
        out = out[:N]
    return out.reshape(*lead_shape, G)


class GaussianSmearing:
    """Mirror of the PyTorch module's __init__ / forward (inference-only)."""

    def __init__(self, start, stop, n_gaussians, centered=False, trainable=False,
                 out_dtype=None):
        offsets = jnp.linspace(start, stop, n_gaussians, dtype=jnp.float32)
        widths = (offsets[1] - offsets[0]) * jnp.ones_like(offsets)
        self.offsets = offsets
        self.width = widths
        self.centered = centered
        self.out_dtype = out_dtype   # e.g. jnp.bfloat16 to halve HBM write traffic

    def __call__(self, distances):
        return gaussian_smearing(distances, self.offsets, self.width,
                                 centered=self.centered, out_dtype=self.out_dtype)


def gaussian_smearing_ref(distances, offset, widths, centered=False):
    """Pure-JAX reference (mirrors the torch implementation exactly)."""
    if not centered:
        coeff = -0.5 / (widths ** 2)
        diff = distances - offset
    else:
        coeff = -0.5 / (offset ** 2)
        diff = distances
    return jnp.exp(coeff * diff ** 2)


if __name__ == "__main__":
    key = jax.random.PRNGKey(0)

    start, stop = 0.0, 5.0
    n_edges = 203   # not a multiple of the r=4 packing factor -> exercises padding

    distances = jax.random.uniform(key, (n_edges, 1), dtype=jnp.float32,
                                   minval=0.0, maxval=stop)

    # Standard (non-centered) smearing, G=32 -> lane-dense (N/4, 128) path.
    smear = GaussianSmearing(start, stop, 32, centered=False)
    out = jax.block_until_ready(smear(distances))
    ref = gaussian_smearing_ref(distances, smear.offsets, smear.width, centered=False)
    assert out.shape == ref.shape == (n_edges, 32)
    assert jnp.allclose(out, ref, atol=1e-5, rtol=1e-5), "mismatch (centered=False, G=32)"

    # Centered variant (offsets act as widths); start > 0 to avoid /0, as in torch.
    smear_c = GaussianSmearing(0.5, stop, 32, centered=True)
    out_c = jax.block_until_ready(smear_c(distances))
    ref_c = gaussian_smearing_ref(distances, smear_c.offsets, smear_c.width, centered=True)
    assert jnp.allclose(out_c, ref_c, atol=1e-5, rtol=1e-5), "mismatch (centered=True)"

    # Fallback path: G=50 does not divide 128 -> un-packed (N, G) layout.
    smear_f = GaussianSmearing(start, stop, 50, centered=False)
    out_f = jax.block_until_ready(smear_f(distances))
    ref_f = gaussian_smearing_ref(distances, smear_f.offsets, smear_f.width, centered=False)
    assert out_f.shape == (n_edges, 50)
    assert jnp.allclose(out_f, ref_f, atol=1e-5, rtol=1e-5), "mismatch (centered=False, G=50)"

    print("KERNEL_OK")
</pallas_src>

<mosaic_0001>
module attributes {stable_mosaic.version = 11 : i64} {
  func.func @_smearing_kernel(%arg0: i32, %arg1: memref<16x4xf32, #tpu.memory_space<vmem>>, %arg2: memref<2x128xf32, #tpu.memory_space<vmem>>, %arg3: memref<16x128xf32, #tpu.memory_space<vmem>>) attributes {dimension_semantics = [#tpu.dimension_semantics<parallel>], iteration_bounds = array<i64: 4>, scalar_prefetch = 0 : i64, scratch_operands = 0 : i64, tpu.core_type = #tpu.core_type<tc>, window_params = [{transform_indices = @transform_0, window_bounds = array<i64: 16, 4>}, {pipeline_mode = #tpu.pipeline_mode<synchronous>, transform_indices = @transform_1, window_bounds = array<i64: 2, 128>}, {transform_indices = @transform_2, window_bounds = array<i64: 16, 128>}]} {
    %c0 = arith.constant 0 : index
    %c0_0 = arith.constant 0 : index
    %0 = vector.load %arg1[%c0, %c0_0] : memref<16x4xf32, #tpu.memory_space<vmem>>, vector<16x4xf32>
    %1 = vector.extract_strided_slice %0 {offsets = [0, 0], sizes = [16, 1], strides = [1, 1]} : vector<16x4xf32> to vector<16x1xf32>
    %2 = vector.shape_cast %1 : vector<16x1xf32> to vector<16x1xf32>
    %3 = vector.broadcast %2 : vector<16x1xf32> to vector<16x32xf32>
    %4 = vector.extract_strided_slice %0 {offsets = [0, 1], sizes = [16, 1], strides = [1, 1]} : vector<16x4xf32> to vector<16x1xf32>
    %5 = vector.shape_cast %4 : vector<16x1xf32> to vector<16x1xf32>
    %6 = vector.broadcast %5 : vector<16x1xf32> to vector<16x32xf32>
    %7 = vector.extract_strided_slice %0 {offsets = [0, 2], sizes = [16, 1], strides = [1, 1]} : vector<16x4xf32> to vector<16x1xf32>
    %8 = vector.shape_cast %7 : vector<16x1xf32> to vector<16x1xf32>
    %9 = vector.broadcast %8 : vector<16x1xf32> to vector<16x32xf32>
    %10 = vector.extract_strided_slice %0 {offsets = [0, 3], sizes = [16, 1], strides = [1, 1]} : vector<16x4xf32> to vector<16x1xf32>
    %11 = vector.shape_cast %10 : vector<16x1xf32> to vector<16x1xf32>
    %12 = vector.broadcast %11 : vector<16x1xf32> to vector<16x32xf32>
    %13 = tpu.concatenate %3, %6, %9, %12 in 1 : vector<16x32xf32>, vector<16x32xf32>, vector<16x32xf32>, vector<16x32xf32> -> vector<16x128xf32>
    %c0_1 = arith.constant 0 : index
    %c0_2 = arith.constant 0 : index
    %14 = vector.load %arg2[%c0_1, %c0_2] : memref<2x128xf32, #tpu.memory_space<vmem>>, vector<2x128xf32>
    %15 = vector.extract_strided_slice %14 {offsets = [1, 0], sizes = [1, 128], strides = [1, 1]} : vector<2x128xf32> to vector<1x128xf32>
    %16 = vector.extract_strided_slice %14 {offsets = [0, 0], sizes = [1, 128], strides = [1, 1]} : vector<2x128xf32> to vector<1x128xf32>
    %17 = vector.broadcast %16 : vector<1x128xf32> to vector<16x128xf32>
    %18 = arith.subf %13, %17 : vector<16x128xf32>
    %19 = arith.mulf %18, %18 : vector<16x128xf32>
    %20 = vector.broadcast %15 : vector<1x128xf32> to vector<16x128xf32>
    %21 = arith.mulf %20, %19 : vector<16x128xf32>
    %22 = math.exp %21 : vector<16x128xf32>
    %c0_3 = arith.constant 0 : index
    %c0_4 = arith.constant 0 : index
    %23 = vector.load %arg3[%c0_3, %c0_4] : memref<16x128xf32, #tpu.memory_space<vmem>>, vector<16x128xf32>
    tpu.vector_store %arg3[%c0_3, %c0_4], %22 {strides = array<i32>} : memref<16x128xf32, #tpu.memory_space<vmem>>, vector<16x128xf32>,
    return
  }
  func.func @transform_0(%arg0: i32) -> (i32, i32) {
    %c0_i32 = arith.constant 0 : i32
    %c0_i32_0 = arith.constant 0 : i32
    return %arg0, %c0_i32 : i32, i32
  }
  func.func @transform_1(%arg0: i32) -> (i32, i32) {
    %c0_i32 = arith.constant 0 : i32
    %c0_i32_0 = arith.constant 0 : i32
    %c0_i32_1 = arith.constant 0 : i32
    return %c0_i32, %c0_i32_0 : i32, i32
  }
  func.func @transform_2(%arg0: i32) -> (i32, i32) {
    %c0_i32 = arith.constant 0 : i32
    %c0_i32_0 = arith.constant 0 : i32
    return %arg0, %c0_i32 : i32, i32
  }
}

</mosaic_0001>

<llo_original>
// kernel: tpu_custom_call.1
$region0: #{tpu_custom_call.1}
  #allocation0 [shape = 'u32[]', space=smem, size = 0x4, offset = 0x4, fixed_abs, tag = 'smem constant byte address 0x4 - core index']
  #allocation1 [shape = 'u32[72,128]{1,0:T(1,128)}', space=vmem, size = 0x9000, scoped, tag = 'internal scratch']
  %s0 = inlined_call_operand.vmem [shape: f32[51,4], index: 0, kind: input, shape index: {}]
  %s1 = inlined_call_operand.vmem [shape: f32[2,128], index: 1, kind: input, shape index: {}]
  %s2 = inlined_call_operand.hbm [shape: f32[51,128], index: 2, kind: output, shape index: {}]
  %s3 = sld [smem:[#allocation0]]
  $region41: #{tpu_custom_call.1} parent=0
    _
  %s5 = ssub.s32 1, %s3
  %s6 = scalar_select 0, %s5, %s3
  $region1: #{tpu_custom_call.1} parent=0
    #allocation2 [shape = 'u8[16384]{0}', space=vmem, size = 0x4000, scoped, tag = 'output window, operand 0']
    #allocation3 [shape = 's32[2]{0}', space=sflag, size = 0x8, scoped, tag = 'scoped memory for tpu_custom_call.1']
    %7 = vsyncpa [#allocation3], 0
    %s8 = scalar_lea.sflag [#allocation3], 1
    %9 = vsyncpa %s8, 0
    loop: start=0, step=1, limit=6
    $region2: #{tpu_custom_call.1} parent=1 // loop_pre_header
      _
    $region3: #{tpu_custom_call.1} parent=1 // loop_header
      %s11 = sphi 0, %s15
      %p12 = scmp.ge.s32.totalorder %s11, 6
      %s21 = sphi 0, %s23
      %s24 = sphi 0, %s21
      %s25 = sphi 0, %s24
      %s41 = sphi 0, %s25
      %s45 = sphi 0, %s45
      %s47 = sphi 0, %s45
      %s48 = sphi 0, %s47
      %s62 = sphi 0, %s48
      %s68 = sphi 0, %s70
      %s71 = sphi 0, %s68
      %s72 = sphi 0, %s71
      %s88 = sphi 0, %s72
    $region4: #{tpu_custom_call.1} parent=1 // loop_header_branch
      %14 = sbr.rel (%p12) target = $region8
    $region5: #{tpu_custom_call.1} parent=1 // loop_body
      %s16 = ssub.s32 %s11, 1
      %s17 = ssub.s32 %s11, 2
      %s18 = sadd.s32 %s11, 1
      %s19 = ssub.s32 %s11, %s18
      %p20 = scmp.eq.s32.totalorder %s19, 0
      %s22 = sadd.s32 %s21, 1
      %s23 = scalar_select %p20, %s21, %s22
      %p26 = pneg %p20
      %p27 = scmp.eq.s32.totalorder %s11, 3
      %p28 = por %p26, %p27
      %p29 = scmp.ne.s32.totalorder %s21, %s24
      %p30 = scmp.eq.s32.totalorder %s11, 0
      %p31 = por %p29, %p30
      %p32 = scmp.ne.s32.totalorder %s21, %s24
      %p33 = scmp.eq.s32.totalorder %s16, 3
      %p34 = por %p32, %p33
      %p35 = scmp.ne.s32.totalorder %s24, %s25
      %p36 = scmp.eq.s32.totalorder %s16, 0
      %p37 = por %p35, %p36
      %p38 = scmp.ne.s32.totalorder %s24, %s25
      %p39 = scmp.eq.s32.totalorder %s17, 3
      %p40 = por %p38, %p39
      %p42 = scmp.ne.s32.totalorder %s25, %s41
      %p43 = scmp.eq.s32.totalorder %s17, 0
      %p44 = por %p42, %p43
      %s46 = sadd.s32 %s45, 1
      %p49 = scmp.eq.s32.totalorder %s11, 3
      %p50 = scmp.ne.s32.totalorder %s45, %s47
      %p51 = scmp.eq.s32.totalorder %s11, 0
      %p52 = por %p50, %p51
      %p53 = scmp.ne.s32.totalorder %s45, %s47
      %p54 = scmp.eq.s32.totalorder %s16, 3
      %p55 = por %p53, %p54
      %p56 = scmp.ne.s32.totalorder %s47, %s48
      %p57 = scmp.eq.s32.totalorder %s16, 0
      %p58 = por %p56, %p57
      %p59 = scmp.ne.s32.totalorder %s47, %s48
      %p60 = scmp.eq.s32.totalorder %s17, 3
      %p61 = por %p59, %p60
      %p63 = scmp.ne.s32.totalorder %s48, %s62
      %p64 = scmp.eq.s32.totalorder %s17, 0
      %p65 = por %p63, %p64
      %s66 = ssub.s32 %s11, %s18
      %p67 = scmp.eq.s32.totalorder %s66, 0
      %s69 = sadd.s32 %s68, 1
      %s70 = scalar_select %p67, %s68, %s69
      %p73 = pneg %p67
      %p74 = scmp.eq.s32.totalorder %s11, 3
      %p75 = por %p73, %p74
      %p76 = scmp.ne.s32.totalorder %s68, %s71
      %p77 = scmp.eq.s32.totalorder %s11, 0
      %p78 = por %p76, %p77
      %p79 = scmp.ne.s32.totalorder %s68, %s71
      %p80 = scmp.eq.s32.totalorder %s16, 3
      %p81 = por %p79, %p80
      %p82 = scmp.ne.s32.totalorder %s71, %s72
      %p83 = scmp.eq.s32.totalorder %s16, 0
      %p84 = por %p82, %p83
      %p85 = scmp.ne.s32.totalorder %s71, %s72
      %p86 = scmp.eq.s32.totalorder %s17, 3
      %p87 = por %p85, %p86
      %p89 = scmp.ne.s32.totalorder %s72, %s88
      %p90 = scmp.eq.s32.totalorder %s17, 0
      %p91 = por %p89, %p90
      %p92 = scmp.le.s32.totalorder 1, %s11
      %p93 = scmp.lt.s32.totalorder %s11, 5
      %p94 = pnand %p92, %p93
      %p95 = pneg %p94
      // Predicated region
      $region9: #{tpu_custom_call.1} parent=5 // pred_check
        _
      $region10: #{tpu_custom_call.1} parent=5 // pred_check_branch
        %97 = sbr.rel (%p94) target = $region12
      $region11: #{tpu_custom_call.1} parent=5 // pred_region
        %s98 = ssub.s32 %s11, 1
        // Predicated region
        $region13: #{tpu_custom_call.1} parent=11 // pred_check
          %p99 = pneg %p58
        $region14: #{tpu_custom_call.1} parent=11 // pred_check_branch
          %101 = sbr.rel (%p99) target = $region16
        $region15: #{tpu_custom_call.1} parent=11 // pred_region
          _
        $region16: #{tpu_custom_call.1} parent=11 // pred_fallthru
          _
      $region12: #{tpu_custom_call.1} parent=5 // pred_fallthru
        _
      %p102 = scmp.lt.s32.totalorder %s11, 4
      // Predicated region
      $region17: #{tpu_custom_call.1} parent=5 // pred_check
        %p103 = pneg %p102
      $region18: #{tpu_custom_call.1} parent=5 // pred_check_branch
        %105 = sbr.rel (%p103) target = $region20
      $region19: #{tpu_custom_call.1} parent=5 // pred_region
        // Predicated region
        $region21: #{tpu_custom_call.1} parent=19 // pred_check
          %p106 = pneg %p31
        $region22: #{tpu_custom_call.1} parent=19 // pred_check_branch
          %108 = sbr.rel (%p106) target = $region24
        $region23: #{tpu_custom_call.1} parent=19 // pred_region
          %s109 = smul.u32 2, %s11
          %s110 = ssub.s32 7, %s109
          %p111 = scmp.lt.s32.totalorder %s110, 2
          %s112 = scalar_select %p111, %s110, 2
          %s113 = smul.u32 8, %s112
          %p114 = scmp.lt.s32.totalorder %s109, 6
          %s115 = scalar_select %p114, %s109, 6
          %s116 = smul.addr %s115, 8
          %s117 = scalar_lea.vmem %s0, %s116
          %s118 = smul.u32 2, %s11
          %s119 = ssub.s32 7, %s118
          %p120 = scmp.lt.s32.totalorder %s119, 2
          %s121 = scalar_select %p120, %s119, 2
          %s122 = smul.u32 8, %s121
        $region24: #{tpu_custom_call.1} parent=19 // pred_fallthru
          _
      $region20: #{tpu_custom_call.1} parent=5 // pred_fallthru
        _
      %p123 = scmp.le.s32.totalorder 1, %s11
      %p124 = scmp.lt.s32.totalorder %s11, 5
      %p125 = pnand %p123, %p124
      %p126 = pneg %p125
      // Predicated region
      $region25: #{tpu_custom_call.1} parent=5 // pred_check
        _
      $region26: #{tpu_custom_call.1} parent=5 // pred_check_branch
        %128 = sbr.rel (%p125) target = $region28
      $region27: #{tpu_custom_call.1} parent=5 // pred_region
        %s129 = ssub.s32 %s11, 1
        %s130 = smul.u32 2, %s16
        %s131 = ssub.s32 7, %s130
        %p132 = scmp.lt.s32.totalorder %s131, 2
        %s133 = scalar_select %p132, %s131, 2
        %s134 = smul.u32 8, %s133
        %p135 = scmp.lt.s32.totalorder %s130, 6
        %s136 = scalar_select %p135, %s130, 6
        %s137 = smul.addr %s136, 8
        %s138 = scalar_lea.vmem %s0, %s137
        %p139 = pneg %p37
        %p140 = pneg %p34
        %p141 = pneg %p58
        %p142 = pneg %p55
        %p143 = pneg %p84
        %p144 = pneg %p81
        %s145 = sand.u32 %s71, 1
        %s146 = scalar_lea.sflag [#allocation3], %s145
        %s147 = sand.u32 %s71, 1
        %s148 = smul.addr %s147, 16
        %s149 = scalar_lea.vmem [#allocation2], %s148
        %s150 = smul.u32 2, %s16
        %s151 = ssub.s32 7, %s150
        %p152 = scmp.lt.s32.totalorder %s151, 2
        %s153 = scalar_select %p152, %s151, 2
        %s154 = smul.u32 8, %s153
        %p155 = scmp.lt.s32.totalorder %s150, 6
        %s156 = scalar_select %p155, %s150, 6
        %s157 = smul.addr %s156, 8
        %s158 = scalar_lea.vmem %s0, %s157
        %s159 = smul.u32 2, %s16
        %s160 = ssub.s32 7, %s159
        %p161 = scmp.lt.s32.totalorder %s160, 2
        %s162 = scalar_select %p161, %s160, 2
        %s163 = smul.u32 8, %s162
        %s164 = smul.u32 2, %s16
        %s165 = ssub.s32 7, %s164
        %p166 = scmp.lt.s32.totalorder %s165, 2
        %s167 = scalar_select %p166, %s165, 2
        %s168 = smul.u32 8, %s167
        %v169 = vld [vmem:[%s158] sm:$0xff]
        %v170 = vld [vmem:[%s158 + $0x8] sm:$0xff]
        %172 = vset.pattern.permute.xlu0 0
        %173 = vperm.xlu0 %172, %v169
        %v174 = vpop.permute.xlu0 %173
        %177 = vset.pattern.permute.xlu0 0
        %178 = vperm.xlu0 %177, %v170
        %v179 = vpop.permute.xlu0 %178
        %181 = vset.pattern.permute.xlu0 1
        %182 = vperm.xlu0 %181, %v169
        %v183 = vpop.permute.xlu0 %182
        %185 = vset.pattern.permute.xlu0 1
        %186 = vperm.xlu0 %185, %v170
        %v187 = vpop.permute.xlu0 %186
        %189 = vset.pattern.permute.xlu0 2
        %190 = vperm.xlu0 %189, %v169
        %v191 = vpop.permute.xlu0 %190
        %193 = vset.pattern.permute.xlu0 2
        %194 = vperm.xlu0 %193, %v170
        %v195 = vpop.permute.xlu0 %194
        %197 = vset.pattern.permute.xlu0 3
        %198 = vperm.xlu0 %197, %v169
        %v199 = vpop.permute.xlu0 %198
        %201 = vset.pattern.permute.xlu0 3
        %202 = vperm.xlu0 %201, %v170
        %v203 = vpop.permute.xlu0 %202
        %vm205 = vcmask 261120
        %v206 = vsel %vm205, %v174, %v183
        %v207 = vsel %vm205, %v179, %v187
        %vm208 = vcmask 523264
        %v209 = vsel %vm208, %v206, %v191
        %v210 = vsel %vm208, %v207, %v195
        %vm211 = vcmask 785408
        %v212 = vsel %vm211, %v209, %v199
        %v213 = vsel %vm211, %v210, %v203
        %v214 = vld [vmem:[%s1] sm:$0x3]
        %v215 = vperm.slane %v214, 0
        %v216 = vsub.f32 %v212, %v215
        %v217 = vsub.f32 %v213, %v215
        %v218 = vmul.f32 %v216, %v216
        %v219 = vmul.f32 %v217, %v217
        %v220 = vperm.slane %v214, 1
        %v221 = vmul.f32 %v220, %v218
        %v222 = vmul.f32 %v220, %v219
        %v223 = vmul.f32 %v221, 1.442695
        %v224 = vpow.pop %v223
        %v225 = vmul.f32 %v222, 1.442695
        %v226 = vpow.pop %v225
        %227 = vst [vmem:[%s149] sm:$0xff] %v224
        %228 = vst [vmem:[%s149 + $0x8] sm:$0xff] %v226
        %s229 = sand.u32 %s71, 1
        %s230 = scalar_lea.sflag [#allocation3], %s229
        %s231 = sand.u32 %s71, 1
        %s232 = smul.addr %s231, 16
        %s233 = scalar_lea.vmem [#allocation2], %s232
        // Predicated region
        $region29: #{tpu_custom_call.1} parent=27 // pred_check
          %p234 = pneg %p81
        $region30: #{tpu_custom_call.1} parent=27 // pred_check_branch
          %236 = sbr.rel (%p234) target = $region32
        $region31: #{tpu_custom_call.1} parent=27 // pred_region
          %s237 = smul.u32 2, %s16
          %s238 = ssub.s32 7, %s237
          %p239 = scmp.lt.s32.totalorder %s238, 2
          %s240 = scalar_select %p239, %s238, 2
          %s241 = smul.u32 8, %s240
          %s242 = ssub.s32 16, %s241
          %s243 = sshll.u32 %s242, 4
          %244 = vsyncadd %s230, %s243
          %p245 = scmp.ne.s32.totalorder 0, %s241
          %s246 = smul.addr %s237, 8
          %s247 = scalar_lea.hbm %s2, %s246
          %s248 = smul.u32 8, %s240
          %s249 = sshll.u32 %s233, 4
          %s250 = int_to_ptr.vmem [resolvable:$true] %s249
          %s251 = sshll.u32 %s247, 4
          %s252 = int_to_ptr.hbm [resolvable:$true] %s251
          %s253 = sshll.u32 %s248, 4
          %257 = dma.vmem_to_hbm [thread:$0]  (%p245), %s250, %s253, %s252, %s230, 128, 128, 8
        $region32: #{tpu_custom_call.1} parent=27 // pred_fallthru
          _
      $region28: #{tpu_custom_call.1} parent=5 // pred_fallthru
        _
      %p258 = scmp.le.s32.totalorder 2, %s11
      // Predicated region
      $region33: #{tpu_custom_call.1} parent=5 // pred_check
        %p259 = pneg %p258
      $region34: #{tpu_custom_call.1} parent=5 // pred_check_branch
        %261 = sbr.rel (%p259) target = $region36
      $region35: #{tpu_custom_call.1} parent=5 // pred_region
        %s262 = ssub.s32 %s11, 2
        // Predicated region
        $region37: #{tpu_custom_call.1} parent=35 // pred_check
          %p263 = pneg %p87
        $region38: #{tpu_custom_call.1} parent=35 // pred_check_branch
          %265 = sbr.rel (%p263) target = $region40
        $region39: #{tpu_custom_call.1} parent=35 // pred_region
          %s266 = sand.u32 %s72, 1
          %s267 = scalar_lea.sflag [#allocation3], %s266
          %s268 = sand.u32 %s72, 1
          %s269 = smul.addr %s268, 16
          %s270 = scalar_lea.vmem [#allocation2], %s269
          %272 = dma.done %s267, 256
        $region40: #{tpu_custom_call.1} parent=35 // pred_fallthru
          _
      $region36: #{tpu_custom_call.1} parent=5 // pred_fallthru
        _
    $region6: #{tpu_custom_call.1} parent=1 // loop_footer
      %s15 = sadd.s32 1, %s11
    $region7: #{tpu_custom_call.1} parent=1 // loop_footer_branch
      %10 = sbr.rel target = $region3
    $region8: #{tpu_custom_call.1} parent=1 // loop_exit
      _
    %273 = vsyncpa [#allocation3], 1
    %s274 = scalar_lea.sflag [#allocation3], 1
    %275 = vsyncpa %s274, 1

</llo_original>
